<compile_context>
chip_gen: v7x
topology: tpu7x:2x2x1
jax: 0.10.0
libtpu: 0.0.40
codegen_flags: <defaults>
</compile_context>

<pallas_src>
import jax
import jax.numpy as jnp
import numpy as np
from jax.experimental import pallas as pl
from jax.experimental.pallas import tpu as pltpu  # noqa: F401  (TPU backend assumed)


# ----------------------------------------------------------------------------
# Fused VAE forward (one pallas_call for the whole network)
# ----------------------------------------------------------------------------
def vae_forward(x, eps, params):
    """x: (N, widths[0]) f32; eps: (N, widths[-1]) f32 standard normal.

    params:
      enc_hidden : list of (w, b) for encoder Linear+ReLU layers
      w_mu, b_mu / w_logvar, b_logvar : split heads of the last encoder Linear
      dec        : list of (w, b) for decoder Linear layers (last one -> Sigmoid)
    Returns (z, mu, logvar, x_rec) exactly like the torch module's forward.
    """
    enc_hidden = params["enc_hidden"]
    dec = params["dec"]
    n_hidden = len(enc_hidden)
    n_dec = len(dec)

    flat = []
    for w, b in enc_hidden:
        flat += [w, b]
    flat += [params["w_mu"], params["b_mu"], params["w_logvar"], params["b_logvar"]]
    for w, b in dec:
        flat += [w, b]
    n_in = 2 + len(flat)  # x, eps, weights/biases

    N, D0 = x.shape
    L = params["w_mu"].shape[1]

    def kernel(*refs):
        x_ref, eps_ref = refs[0], refs[1]
        p_refs = refs[2:n_in]
        z_ref, mu_ref, lv_ref, xr_ref = refs[n_in:]

        idx = 0
        h = x_ref[...]
        # Encoder hidden layers: Linear + ReLU  (MXU matmul + VPU max)
        for _ in range(n_hidden):
            w = p_refs[idx][...]
            b = p_refs[idx + 1][...]
            idx += 2
            h = jnp.maximum(
                jnp.dot(h, w, preferred_element_type=jnp.float32) + b, 0.0)

        # Last encoder layer (Identity activation), split into mu / logvar heads
        # (the interleaved even/odd column split was done host-side on the weights).
        w_mu = p_refs[idx][...]
        b_mu = p_refs[idx + 1][...]
        w_lv = p_refs[idx + 2][...]
        b_lv = p_refs[idx + 3][...]
        idx += 4
        mu = jnp.dot(h, w_mu, preferred_element_type=jnp.float32) + b_mu
        logvar = jnp.dot(h, w_lv, preferred_element_type=jnp.float32) + b_lv

        # Reparameterisation: z = mu + eps * exp(0.5 * logvar)   (exp -> EUP)
        std = jnp.exp(0.5 * logvar)
        z = mu + eps_ref[...] * std

        # Decoder: Linear + ReLU, ..., Linear + Sigmoid
        h = z
        for k in range(n_dec):
            w = p_refs[idx][...]
            b = p_refs[idx + 1][...]
            idx += 2
            h = jnp.dot(h, w, preferred_element_type=jnp.float32) + b
            if k != n_dec - 1:
                h = jnp.maximum(h, 0.0)
            else:
                h = jax.nn.sigmoid(h)

        z_ref[...] = z
        mu_ref[...] = mu
        lv_ref[...] = logvar
        xr_ref[...] = h

    out_shapes = (
        jax.ShapeDtypeStruct((N, L), jnp.float32),    # z
        jax.ShapeDtypeStruct((N, L), jnp.float32),    # mu
        jax.ShapeDtypeStruct((N, L), jnp.float32),    # logvar
        jax.ShapeDtypeStruct((N, D0), jnp.float32),   # x_rec
    )
    # No grid: every array is tiny and becomes a single full-extent VMEM block, so
    # the whole forward runs in one kernel invocation with weights resident in
    # VMEM.  (At large batch, a batch grid axis marked "parallel" over tm-sized
    # tiles would be the natural extension for v7x's two TensorCores.)
    return pl.pallas_call(kernel, out_shape=out_shapes)(x, eps, *flat)


# ----------------------------------------------------------------------------
# Parameters (deterministic synthetic init, PyTorch-Linear-equivalent layout)
# ----------------------------------------------------------------------------
def init_params(key, widths):
    """Raw params matching the torch module layout (last enc layer -> 2*latent)."""
    n = len(widths) - 1
    keys = list(jax.random.split(key, 4 * n))
    it = iter(keys)

    def rnd(shape, scale):
        return scale * jax.random.normal(next(it), shape, jnp.float32)

    enc = []
    for i in range(n):
        dout = widths[i + 1] * 2 if i == n - 1 else widths[i + 1]
        s = 1.0 / np.sqrt(widths[i])
        enc.append((rnd((widths[i], dout), s), rnd((1, dout), s)))
    dec = []
    for i in range(n)[::-1]:
        s = 1.0 / np.sqrt(widths[i + 1])
        dec.append((rnd((widths[i + 1], widths[i]), s), rnd((1, widths[i]), s)))
    return {"enc": enc, "dec": dec}


def prep_params(raw, widths):
    """One-time layout glue: split the last encoder Linear into mu/logvar heads.

    torch does z.view(N, -1, 2); mu = z[:,:,0]; logvar = z[:,:,1], i.e. mu lives in
    the even output columns and logvar in the odd ones.
    """
    n = len(widths) - 1
    w_last, b_last = raw["enc"][n - 1]
    return {
        "enc_hidden": [raw["enc"][i] for i in range(n - 1)],
        "w_mu": w_last[:, 0::2], "b_mu": b_last[:, 0::2],
        "w_logvar": w_last[:, 1::2], "b_logvar": b_last[:, 1::2],
        "dec": raw["dec"],
    }


# ----------------------------------------------------------------------------
# Pure-JAX reference (mirrors the torch forward exactly, incl. the interleave)
# ----------------------------------------------------------------------------
def reference_forward(x, eps, raw, widths):
    n = len(widths) - 1
    h = x
    for i in range(n):
        w, b = raw["enc"][i]
        h = h @ w + b
        if i != n - 1:
            h = jnp.maximum(h, 0.0)
    zc = h.reshape(h.shape[0], -1, 2)
    mu, logvar = zc[:, :, 0], zc[:, :, 1]
    std = jnp.exp(0.5 * logvar)
    z = mu + eps * std
    h = z
    for k in range(n):
        w, b = raw["dec"][k]
        h = h @ w + b
        h = jnp.maximum(h, 0.0) if k != n - 1 else jax.nn.sigmoid(h)
    return z, mu, logvar, h


if __name__ == "__main__":
    widths = [64, 32, 8]          # widths[0]=input dim, widths[-1]=latent dim
    N = 8

    key = jax.random.PRNGKey(0)
    kx, keps, kp = jax.random.split(key, 3)
    x = jax.random.uniform(kx, (N, widths[0]), jnp.float32)
    eps = jax.random.normal(keps, (N, widths[-1]), jnp.float32)

    raw = init_params(kp, widths)
    params = prep_params(raw, widths)

    fwd = jax.jit(vae_forward)
    z, mu, logvar, x_rec = fwd(x, eps, params)
    jax.block_until_ready((z, mu, logvar, x_rec))

    assert z.shape == (N, widths[-1])
    assert mu.shape == (N, widths[-1])
    assert logvar.shape == (N, widths[-1])
    assert x_rec.shape == (N, widths[0])

    z_r, mu_r, lv_r, xr_r = reference_forward(x, eps, raw, widths)
    np.testing.assert_allclose(np.asarray(mu), np.asarray(mu_r), rtol=1e-5, atol=1e-5)
    np.testing.assert_allclose(np.asarray(logvar), np.asarray(lv_r), rtol=1e-5, atol=1e-5)
    np.testing.assert_allclose(np.asarray(z), np.asarray(z_r), rtol=1e-5, atol=1e-5)
    np.testing.assert_allclose(np.asarray(x_rec), np.asarray(xr_r), rtol=1e-5, atol=1e-5)
    print("KERNEL_OK")
</pallas_src>

<mosaic_0001>
module attributes {stable_mosaic.version = 11 : i64} {
  func.func @kernel(%arg0: memref<8x64xf32, #tpu.memory_space<vmem>>, %arg1: memref<8x8xf32, #tpu.memory_space<vmem>>, %arg2: memref<64x32xf32, #tpu.memory_space<vmem>>, %arg3: memref<1x32xf32, #tpu.memory_space<vmem>>, %arg4: memref<32x8xf32, #tpu.memory_space<vmem>>, %arg5: memref<1x8xf32, #tpu.memory_space<vmem>>, %arg6: memref<32x8xf32, #tpu.memory_space<vmem>>, %arg7: memref<1x8xf32, #tpu.memory_space<vmem>>, %arg8: memref<8x32xf32, #tpu.memory_space<vmem>>, %arg9: memref<1x32xf32, #tpu.memory_space<vmem>>, %arg10: memref<32x64xf32, #tpu.memory_space<vmem>>, %arg11: memref<1x64xf32, #tpu.memory_space<vmem>>, %arg12: memref<8x8xf32, #tpu.memory_space<vmem>>, %arg13: memref<8x8xf32, #tpu.memory_space<vmem>>, %arg14: memref<8x8xf32, #tpu.memory_space<vmem>>, %arg15: memref<8x64xf32, #tpu.memory_space<vmem>>) attributes {dimension_semantics = [], scalar_prefetch = 0 : i64, scratch_operands = 0 : i64, tpu.core_type = #tpu.core_type<tc>} {
    %c0 = arith.constant 0 : index
    %c0_0 = arith.constant 0 : index
    %0 = vector.load %arg0[%c0, %c0_0] : memref<8x64xf32, #tpu.memory_space<vmem>>, vector<8x64xf32>
    %c0_1 = arith.constant 0 : index
    %c0_2 = arith.constant 0 : index
    %1 = vector.load %arg2[%c0_1, %c0_2] : memref<64x32xf32, #tpu.memory_space<vmem>>, vector<64x32xf32>
    %c0_3 = arith.constant 0 : index
    %c0_4 = arith.constant 0 : index
    %2 = vector.load %arg3[%c0_3, %c0_4] : memref<1x32xf32, #tpu.memory_space<vmem>>, vector<1x32xf32>
    %cst = arith.constant dense<0.000000e+00> : vector<8x32xf32>
    %3 = tpu.matmul %0, %1, %cst {dimension_numbers = #tpu.dot_dimension_numbers<[1], [0], [0], [1], [0, 0, 1, 1], [], []>} : vector<8x64xf32>, vector<64x32xf32>, vector<8x32xf32> -> vector<8x32xf32>
    %4 = vector.broadcast %2 : vector<1x32xf32> to vector<8x32xf32>
    %5 = arith.addf %3, %4 : vector<8x32xf32>
    %cst_5 = arith.constant 0.000000e+00 : f32
    %6 = vector.broadcast %cst_5 : f32 to vector<8x32xf32>
    %7 = arith.maximumf %5, %6 : vector<8x32xf32>
    %c0_6 = arith.constant 0 : index
    %c0_7 = arith.constant 0 : index
    %8 = vector.load %arg4[%c0_6, %c0_7] : memref<32x8xf32, #tpu.memory_space<vmem>>, vector<32x8xf32>
    %c0_8 = arith.constant 0 : index
    %c0_9 = arith.constant 0 : index
    %9 = vector.load %arg5[%c0_8, %c0_9] : memref<1x8xf32, #tpu.memory_space<vmem>>, vector<1x8xf32>
    %c0_10 = arith.constant 0 : index
    %c0_11 = arith.constant 0 : index
    %10 = vector.load %arg6[%c0_10, %c0_11] : memref<32x8xf32, #tpu.memory_space<vmem>>, vector<32x8xf32>
    %c0_12 = arith.constant 0 : index
    %c0_13 = arith.constant 0 : index
    %11 = vector.load %arg7[%c0_12, %c0_13] : memref<1x8xf32, #tpu.memory_space<vmem>>, vector<1x8xf32>
    %cst_14 = arith.constant dense<0.000000e+00> : vector<8x8xf32>
    %12 = tpu.matmul %7, %8, %cst_14 {dimension_numbers = #tpu.dot_dimension_numbers<[1], [0], [0], [1], [0, 0, 1, 1], [], []>} : vector<8x32xf32>, vector<32x8xf32>, vector<8x8xf32> -> vector<8x8xf32>
    %13 = vector.broadcast %9 : vector<1x8xf32> to vector<8x8xf32>
    %14 = arith.addf %12, %13 : vector<8x8xf32>
    %cst_15 = arith.constant dense<0.000000e+00> : vector<8x8xf32>
    %15 = tpu.matmul %7, %10, %cst_15 {dimension_numbers = #tpu.dot_dimension_numbers<[1], [0], [0], [1], [0, 0, 1, 1], [], []>} : vector<8x32xf32>, vector<32x8xf32>, vector<8x8xf32> -> vector<8x8xf32>
    %16 = vector.broadcast %11 : vector<1x8xf32> to vector<8x8xf32>
    %17 = arith.addf %15, %16 : vector<8x8xf32>
    %cst_16 = arith.constant 5.000000e-01 : f32
    %18 = vector.broadcast %cst_16 : f32 to vector<8x8xf32>
    %19 = arith.mulf %18, %17 : vector<8x8xf32>
    %20 = math.exp %19 : vector<8x8xf32>
    %c0_17 = arith.constant 0 : index
    %c0_18 = arith.constant 0 : index
    %21 = vector.load %arg1[%c0_17, %c0_18] : memref<8x8xf32, #tpu.memory_space<vmem>>, vector<8x8xf32>
    %22 = arith.mulf %21, %20 : vector<8x8xf32>
    %23 = arith.addf %14, %22 : vector<8x8xf32>
    %c0_19 = arith.constant 0 : index
    %c0_20 = arith.constant 0 : index
    %24 = vector.load %arg8[%c0_19, %c0_20] : memref<8x32xf32, #tpu.memory_space<vmem>>, vector<8x32xf32>
    %c0_21 = arith.constant 0 : index
    %c0_22 = arith.constant 0 : index
    %25 = vector.load %arg9[%c0_21, %c0_22] : memref<1x32xf32, #tpu.memory_space<vmem>>, vector<1x32xf32>
    %cst_23 = arith.constant dense<0.000000e+00> : vector<8x32xf32>
    %26 = tpu.matmul %23, %24, %cst_23 {dimension_numbers = #tpu.dot_dimension_numbers<[1], [0], [0], [1], [0, 0, 1, 1], [], []>} : vector<8x8xf32>, vector<8x32xf32>, vector<8x32xf32> -> vector<8x32xf32>
    %27 = vector.broadcast %25 : vector<1x32xf32> to vector<8x32xf32>
    %28 = arith.addf %26, %27 : vector<8x32xf32>
    %cst_24 = arith.constant 0.000000e+00 : f32
    %29 = vector.broadcast %cst_24 : f32 to vector<8x32xf32>
    %30 = arith.maximumf %28, %29 : vector<8x32xf32>
    %c0_25 = arith.constant 0 : index
    %c0_26 = arith.constant 0 : index
    %31 = vector.load %arg10[%c0_25, %c0_26] : memref<32x64xf32, #tpu.memory_space<vmem>>, vector<32x64xf32>
    %c0_27 = arith.constant 0 : index
    %c0_28 = arith.constant 0 : index
    %32 = vector.load %arg11[%c0_27, %c0_28] : memref<1x64xf32, #tpu.memory_space<vmem>>, vector<1x64xf32>
    %cst_29 = arith.constant dense<0.000000e+00> : vector<8x64xf32>
    %33 = tpu.matmul %30, %31, %cst_29 {dimension_numbers = #tpu.dot_dimension_numbers<[1], [0], [0], [1], [0, 0, 1, 1], [], []>} : vector<8x32xf32>, vector<32x64xf32>, vector<8x64xf32> -> vector<8x64xf32>
    %34 = vector.broadcast %32 : vector<1x64xf32> to vector<8x64xf32>
    %35 = arith.addf %33, %34 : vector<8x64xf32>
    %36 = arith.negf %35 : vector<8x64xf32>
    %37 = math.exp %36 : vector<8x64xf32>
    %cst_30 = arith.constant 1.000000e+00 : f32
    %38 = vector.broadcast %cst_30 : f32 to vector<8x64xf32>
    %39 = arith.addf %38, %37 : vector<8x64xf32>
    %40 = arith.divf %38, %39 : vector<8x64xf32>
    %c0_31 = arith.constant 0 : index
    %c0_32 = arith.constant 0 : index
    %41 = vector.load %arg12[%c0_31, %c0_32] : memref<8x8xf32, #tpu.memory_space<vmem>>, vector<8x8xf32>
    tpu.vector_store %arg12[%c0_31, %c0_32], %23 {strides = array<i32>} : memref<8x8xf32, #tpu.memory_space<vmem>>, vector<8x8xf32>,
    %c0_33 = arith.constant 0 : index
    %c0_34 = arith.constant 0 : index
    %42 = vector.load %arg13[%c0_33, %c0_34] : memref<8x8xf32, #tpu.memory_space<vmem>>, vector<8x8xf32>
    tpu.vector_store %arg13[%c0_33, %c0_34], %14 {strides = array<i32>} : memref<8x8xf32, #tpu.memory_space<vmem>>, vector<8x8xf32>,
    %c0_35 = arith.constant 0 : index
    %c0_36 = arith.constant 0 : index
    %43 = vector.load %arg14[%c0_35, %c0_36] : memref<8x8xf32, #tpu.memory_space<vmem>>, vector<8x8xf32>
    tpu.vector_store %arg14[%c0_35, %c0_36], %17 {strides = array<i32>} : memref<8x8xf32, #tpu.memory_space<vmem>>, vector<8x8xf32>,
    %c0_37 = arith.constant 0 : index
    %c0_38 = arith.constant 0 : index
    %44 = vector.load %arg15[%c0_37, %c0_38] : memref<8x64xf32, #tpu.memory_space<vmem>>, vector<8x64xf32>
    tpu.vector_store %arg15[%c0_37, %c0_38], %40 {strides = array<i32>} : memref<8x64xf32, #tpu.memory_space<vmem>>, vector<8x64xf32>,
    return
  }
}

</mosaic_0001>

<llo_original>
// kernel: vae_forward.1
$region0: #{vae_forward.1}
  #allocation0 [shape = 'u32[]', space=smem, size = 0x4, offset = 0x4, fixed_abs, tag = 'smem constant byte address 0x4 - core index']
  #allocation1 [shape = 'u32[144,128]{1,0:T(1,128)}', space=vmem, size = 0x12000, scoped, tag = 'internal scratch']
  %s0 = inlined_call_operand.vmem [shape: f32[8,64], index: 0, kind: input, shape index: {}]
  %s1 = inlined_call_operand.vmem [shape: f32[8,8], index: 1, kind: input, shape index: {}]
  %s2 = inlined_call_operand.vmem [shape: f32[64,32], index: 2, kind: input, shape index: {}]
  %s3 = inlined_call_operand.vmem [shape: f32[1,32], index: 3, kind: input, shape index: {}]
  %s4 = inlined_call_operand.vmem [shape: f32[32,8], index: 4, kind: input, shape index: {}]
  %s5 = inlined_call_operand.vmem [shape: f32[1,8], index: 5, kind: input, shape index: {}]
  %s6 = inlined_call_operand.vmem [shape: f32[32,8], index: 6, kind: input, shape index: {}]
  %s7 = inlined_call_operand.vmem [shape: f32[1,8], index: 7, kind: input, shape index: {}]
  %s8 = inlined_call_operand.vmem [shape: f32[8,32], index: 8, kind: input, shape index: {}]
  %s9 = inlined_call_operand.vmem [shape: f32[1,32], index: 9, kind: input, shape index: {}]
  %s10 = inlined_call_operand.vmem [shape: f32[32,64], index: 10, kind: input, shape index: {}]
  %s11 = inlined_call_operand.vmem [shape: f32[1,64], index: 11, kind: input, shape index: {}]
  %s12 = inlined_call_operand.hbm [shape: f32[8,8], index: 12, kind: output, shape index: {0}]
  %s13 = inlined_call_operand.hbm [shape: f32[8,8], index: 13, kind: output, shape index: {1}]
  %s14 = inlined_call_operand.hbm [shape: f32[8,8], index: 14, kind: output, shape index: {2}]
  %s15 = inlined_call_operand.hbm [shape: f32[8,64], index: 15, kind: output, shape index: {3}]
  %16 = xla_tuple %s12, %s13, %s14, %s15
  %s17 = sld [smem:[#allocation0]]
  $region82: #{vae_forward.1} parent=0
    _
  %s19 = ssub.s32 1, %s17
  %s20 = scalar_select 0, %s19, %s17
  $region1: #{vae_forward.1} parent=0
    #allocation2 [shape = 'u8[4096]{0}', space=vmem, size = 0x1000, scoped, tag = 'output window, operand 0, single buffered']
    #allocation3 [shape = 's32[1]{0}', space=sflag, size = 0x4, scoped, tag = 'scoped memory for vae_forward.1']
    #allocation4 [shape = 'u8[4096]{0}', space=vmem, size = 0x1000, scoped, tag = 'output window, operand 1, single buffered']
    #allocation5 [shape = 's32[1]{0}', space=sflag, size = 0x4, scoped, tag = 'scoped memory for vae_forward.1']
    #allocation6 [shape = 'u8[4096]{0}', space=vmem, size = 0x1000, scoped, tag = 'output window, operand 2, single buffered']
    #allocation7 [shape = 'u8[4096]{0}', space=vmem, size = 0x1000, scoped, tag = 'output window, operand 3, single buffered']
    #allocation8 [shape = 's32[1]{0}', space=sflag, size = 0x4, scoped, tag = 'scoped memory for vae_forward.1']
    %21 = vsyncpa [#allocation3], 0
    %22 = vsyncpa [#allocation5], 0
    %23 = vsyncpa [#allocation8], 0
    // Predicated region
    $region2: #{vae_forward.1} parent=1 // pred_check
      _
    $region3: #{vae_forward.1} parent=1 // pred_check_branch
      %25 = sbr.rel (0) target = $region5
    $region4: #{vae_forward.1} parent=1 // pred_region
      _
    $region5: #{vae_forward.1} parent=1 // pred_fallthru
      _
    // Predicated region
    $region6: #{vae_forward.1} parent=1 // pred_check
      _
    $region7: #{vae_forward.1} parent=1 // pred_check_branch
      %27 = sbr.rel (0) target = $region9
    $region8: #{vae_forward.1} parent=1 // pred_region
      _
    $region9: #{vae_forward.1} parent=1 // pred_fallthru
      _
    // Predicated region
    $region10: #{vae_forward.1} parent=1 // pred_check
      _
    $region11: #{vae_forward.1} parent=1 // pred_check_branch
      %29 = sbr.rel (0) target = $region13
    $region12: #{vae_forward.1} parent=1 // pred_region
      _
    $region13: #{vae_forward.1} parent=1 // pred_fallthru
      _
    // Predicated region
    $region14: #{vae_forward.1} parent=1 // pred_check
      _
    $region15: #{vae_forward.1} parent=1 // pred_check_branch
      %31 = sbr.rel (0) target = $region17
    $region16: #{vae_forward.1} parent=1 // pred_region
      _
    $region17: #{vae_forward.1} parent=1 // pred_fallthru
      _
    // Predicated region
    $region18: #{vae_forward.1} parent=1 // pred_check
      _
    $region19: #{vae_forward.1} parent=1 // pred_check_branch
      %33 = sbr.rel (0) target = $region21
    $region20: #{vae_forward.1} parent=1 // pred_region
      _
    $region21: #{vae_forward.1} parent=1 // pred_fallthru
      _
    // Predicated region
    $region22: #{vae_forward.1} parent=1 // pred_check
      _
    $region23: #{vae_forward.1} parent=1 // pred_check_branch
      %35 = sbr.rel (0) target = $region25
    $region24: #{vae_forward.1} parent=1 // pred_region
      _
    $region25: #{vae_forward.1} parent=1 // pred_fallthru
      _
    // Predicated region
    $region26: #{vae_forward.1} parent=1 // pred_check
      _
    $region27: #{vae_forward.1} parent=1 // pred_check_branch
      %37 = sbr.rel (0) target = $region29
    $region28: #{vae_forward.1} parent=1 // pred_region
      _
    $region29: #{vae_forward.1} parent=1 // pred_fallthru
      _
    // Predicated region
    $region30: #{vae_forward.1} parent=1 // pred_check
      _
    $region31: #{vae_forward.1} parent=1 // pred_check_branch
      %39 = sbr.rel (0) target = $region33
    $region32: #{vae_forward.1} parent=1 // pred_region
      _
    $region33: #{vae_forward.1} parent=1 // pred_fallthru
      _
    // Predicated region
    $region34: #{vae_forward.1} parent=1 // pred_check
      _
    $region35: #{vae_forward.1} parent=1 // pred_check_branch
      %41 = sbr.rel (0) target = $region37
    $region36: #{vae_forward.1} parent=1 // pred_region
      _
    $region37: #{vae_forward.1} parent=1 // pred_fallthru
      _
    // Predicated region
    $region38: #{vae_forward.1} parent=1 // pred_check
      _
    $region39: #{vae_forward.1} parent=1 // pred_check_branch
      %43 = sbr.rel (0) target = $region41
    $region40: #{vae_forward.1} parent=1 // pred_region
      _
    $region41: #{vae_forward.1} parent=1 // pred_fallthru
      _
    // Predicated region
    $region42: #{vae_forward.1} parent=1 // pred_check
      _
    $region43: #{vae_forward.1} parent=1 // pred_check_branch
      %45 = sbr.rel (0) target = $region45
    $region44: #{vae_forward.1} parent=1 // pred_region
      _
    $region45: #{vae_forward.1} parent=1 // pred_fallthru
      _
    // Predicated region
    $region46: #{vae_forward.1} parent=1 // pred_check
      _
    $region47: #{vae_forward.1} parent=1 // pred_check_branch
      %47 = sbr.rel (0) target = $region49
    $region48: #{vae_forward.1} parent=1 // pred_region
      _
    $region49: #{vae_forward.1} parent=1 // pred_fallthru
      _
    %v48 = vld [vmem:[%s0] sm:$0xff]
    %v49 = vld [vmem:[%s2] sm:$0xff]
    %v50 = vld [vmem:[%s2 + $0x8] sm:$0xff]
    %v51 = vld [vmem:[%s2 + $0x10] sm:$0xff]
    %v52 = vld [vmem:[%s2 + $0x18] sm:$0xff]
    %v53 = vld [vmem:[%s2 + $0x20] sm:$0xff]
    %v54 = vld [vmem:[%s2 + $0x28] sm:$0xff]
    %v55 = vld [vmem:[%s2 + $0x30] sm:$0xff]
    %v56 = vld [vmem:[%s2 + $0x38] sm:$0xff]
    %v57 = vld [vmem:[%s3] sm:$0x1]
    %v59 = vlaneseq
    %v60 = vshrl.u32 %v59, 7
    %v61 = vsub.s32 0, %v60
    %v62 = vrot.slane %v57, %v61
    %vm64 = vcmask 523264
    %v66 = vsel %vm64, %v48, 0
    %68 = vmatprep.subr.mxu0 0.0
    %69 = vmatpush1.msra.mxu0 %v49
    %70 = vmatprep.subr.mxu0 0.0
    %71 = vmatpush1.msra.mxu0 %v50
    %72 = vmatprep.subr.mxu0 0.0
    %73 = vmatpush1.msra.mxu0 %v51
    %74 = vmatprep.subr.mxu0 0.0
    %75 = vmatpush1.msra.mxu0 %v52
    %76 = vmatprep.subr.mxu0 0.0
    %77 = vmatpush1.msra.mxu0 %v53
    %78 = vmatprep.subr.mxu0 0.0
    %79 = vmatpush1.msra.mxu0 %v54
    %80 = vmatprep.subr.mxu0 0.0
    %81 = vmatpush1.msra.mxu0 %v55
    %82 = vmatprep.subr.mxu0 0.0
    %83 = vmatpush1.msra.mxu0 %v56
    %84 = vmatprep.subr.mxu0 0.0
    %85 = vmatpush1.msra.mxu0 0.0
    %86 = vmatprep.subr.mxu0 0.0
    %87 = vmatpush1.msra.mxu0 0.0
    %88 = vmatprep.subr.mxu0 0.0
    %89 = vmatpush1.msra.mxu0 0.0
    %90 = vmatprep.subr.mxu0 0.0
    %91 = vmatpush1.msra.mxu0 0.0
    %92 = vmatprep.subr.mxu0 0.0
    %93 = vmatpush1.msra.mxu0 0.0
    %94 = vmatprep.subr.mxu0 0.0
    %95 = vmatpush1.msra.mxu0 0.0
    %96 = vmatprep.subr.mxu0 0.0
    %97 = vmatpush1.msra.mxu0 0.0
    %98 = vmatprep.subr.mxu0 0.0
    %99 = vmatpush1.msra.mxu0 0.0
    %100 = vmatprep.subr.mxu0 0.0
    %101 = vmatpush1.msra.mxu0 0.0
    %102 = vmatprep.subr.mxu0 0.0
    %103 = vmatpush1.msra.mxu0 0.0
    %104 = vmatprep.subr.mxu0 0.0
    %105 = vmatpush1.msra.mxu0 0.0
    %106 = vmatprep.subr.mxu0 0.0
    %107 = vmatpush1.msra.mxu0 0.0
    %108 = vmatprep.subr.mxu0 0.0
    %109 = vmatpush1.msra.mxu0 0.0
    %110 = vmatprep.subr.mxu0 0.0
    %111 = vmatpush1.msra.mxu0 0.0
    %112 = vmatprep.subr.mxu0 0.0
    %113 = vmatpush1.msra.mxu0 0.0
    %114 = vmatprep.subr.mxu0 0.0
    %115 = vmatpush1.msra.mxu0 0.0
    %116 = vmatprep.subr.mxu0 0.0
    %117 = vmatpush1.msra.mxu0 0.0
    %118 = vmatprep.subr.mxu0 0.0
    %119 = vmatpush1.msra.mxu0 0.0
    %120 = vmatprep.subr.mxu0 0.0
    %121 = vmatpush1.msra.mxu0 0.0
    %122 = vmatprep.subr.mxu0 0.0
    %123 = vmatpush1.msra.mxu0 0.0
    %124 = vmatprep.subr.mxu0 0.0
    %125 = vmatpush1.msra.mxu0 0.0
    %126 = vmatprep.subr.mxu0 0.0
    %127 = vmatpush1.msra.mxu0 0.0
    %128 = vmatprep.subr.mxu0 0.0
    %129 = vmatpush1.msra.mxu0 0.0
    %130 = vmatprep.subr.mxu0 0.0
    %131 = vmatpush1.msra.mxu0 0.0
    %132 = vmatprep.mubr.f32.mxu0 0.0
    %133 = vmatmul.mubr.f32.gmra.mrb[0].mxu0 %v66
    %v134 = vpop.f32.mrb[0].mxu0
    %v135 = vadd.f32 %v62, %v134
    %v136 = vpop.f32.mrb[0].mxu0
    %137 = vdwg.mxu0
    %v138 = vmax.f32 %v135, 0.0
    %v139 = vld [vmem:[%s4] sm:$0xff]
    %v140 = vld [vmem:[%s4 + $0x8] sm:$0xff]
    %v141 = vld [vmem:[%s4 + $0x10] sm:$0xff]
    %v142 = vld [vmem:[%s4 + $0x18] sm:$0xff]
    %v143 = vld [vmem:[%s5] sm:$0x1]
    %v144 = vld [vmem:[%s6] sm:$0xff]
    %v145 = vld [vmem:[%s6 + $0x8] sm:$0xff]
    %v146 = vld [vmem:[%s6 + $0x10] sm:$0xff]
    %v147 = vld [vmem:[%s6 + $0x18] sm:$0xff]
    %v148 = vld [vmem:[%s7] sm:$0x1]
    %v150 = vlaneseq
    %v151 = vshrl.u32 %v150, 7
    %v152 = vsub.s32 0, %v151
    %v153 = vrot.slane %v143, %v152
    %vm155 = vcmask 261120
    %v157 = vsel %vm155, %v138, 0
    %159 = vmatprep.subr.mxu0 0.0
    %160 = vmatpush1.msra.mxu0 %v139
    %161 = vmatprep.subr.mxu0 0.0
    %162 = vmatpush1.msra.mxu0 %v140
    %163 = vmatprep.subr.mxu0 0.0
    %164 = vmatpush1.msra.mxu0 %v141
    %165 = vmatprep.subr.mxu0 0.0
    %166 = vmatpush1.msra.mxu0 %v142
    %167 = vmatprep.subr.mxu0 0.0
    %168 = vmatpush1.msra.mxu0 0.0
    %169 = vmatprep.subr.mxu0 0.0
    %170 = vmatpush1.msra.mxu0 0.0
    %171 = vmatprep.subr.mxu0 0.0
    %172 = vmatpush1.msra.mxu0 0.0
    %173 = vmatprep.subr.mxu0 0.0
    %174 = vmatpush1.msra.mxu0 0.0
    %175 = vmatprep.subr.mxu0 0.0
    %176 = vmatpush1.msra.mxu0 0.0
    %177 = vmatprep.subr.mxu0 0.0
    %178 = vmatpush1.msra.mxu0 0.0
    %179 = vmatprep.subr.mxu0 0.0
    %180 = vmatpush1.msra.mxu0 0.0
    %181 = vmatprep.subr.mxu0 0.0
    %182 = vmatpush1.msra.mxu0 0.0
    %183 = vmatprep.subr.mxu0 0.0
    %184 = vmatpush1.msra.mxu0 0.0
    %185 = vmatprep.subr.mxu0 0.0
    %186 = vmatpush1.msra.mxu0 0.0
    %187 = vmatprep.subr.mxu0 0.0
    %188 = vmatpush1.msra.mxu0 0.0
    %189 = vmatprep.subr.mxu0 0.0
    %190 = vmatpush1.msra.mxu0 0.0
    %191 = vmatprep.subr.mxu0 0.0
    %192 = vmatpush1.msra.mxu0 0.0
    %193 = vmatprep.subr.mxu0 0.0
    %194 = vmatpush1.msra.mxu0 0.0
    %195 = vmatprep.subr.mxu0 0.0
    %196 = vmatpush1.msra.mxu0 0.0
    %197 = vmatprep.subr.mxu0 0.0
    %198 = vmatpush1.msra.mxu0 0.0
    %199 = vmatprep.subr.mxu0 0.0
    %200 = vmatpush1.msra.mxu0 0.0
    %201 = vmatprep.subr.mxu0 0.0
    %202 = vmatpush1.msra.mxu0 0.0
    %203 = vmatprep.subr.mxu0 0.0
    %204 = vmatpush1.msra.mxu0 0.0
    %205 = vmatprep.subr.mxu0 0.0
    %206 = vmatpush1.msra.mxu0 0.0
    %207 = vmatprep.subr.mxu0 0.0
    %208 = vmatpush1.msra.mxu0 0.0
    %209 = vmatprep.subr.mxu0 0.0
    %210 = vmatpush1.msra.mxu0 0.0
    %211 = vmatprep.subr.mxu0 0.0
    %212 = vmatpush1.msra.mxu0 0.0
    %213 = vmatprep.subr.mxu0 0.0
    %214 = vmatpush1.msra.mxu0 0.0
    %215 = vmatprep.subr.mxu0 0.0
    %216 = vmatpush1.msra.mxu0 0.0
    %217 = vmatprep.subr.mxu0 0.0
    %218 = vmatpush1.msra.mxu0 0.0
    %219 = vmatprep.subr.mxu0 0.0
    %220 = vmatpush1.msra.mxu0 0.0
    %221 = vmatprep.subr.mxu0 0.0
    %222 = vmatpush1.msra.mxu0 0.0
    %223 = vmatprep.mubr.f32.mxu0 0.0
    %224 = vmatmul.mubr.f32.gmra.mrb[0].mxu0 %v157
    %v225 = vpop.f32.mrb[0].mxu0
    %v226 = vadd.f32 %v153, %v225
    %v227 = vpop.f32.mrb[0].mxu0
    %228 = vdwg.mxu0
    %v230 = vlaneseq
    %v231 = vshrl.u32 %v230, 7
    %v232 = vsub.s32 0, %v231
    %v233 = vrot.slane %v148, %v232
    %235 = vmatprep.subr.mxu0 0.0
    %236 = vmatpush1.msra.mxu0 %v144
    %237 = vmatprep.subr.mxu0 0.0
    %238 = vmatpush1.msra.mxu0 %v145
    %239 = vmatprep.subr.mxu0 0.0
    %240 = vmatpush1.msra.mxu0 %v146
    %241 = vmatprep.subr.mxu0 0.0
    %242 = vmatpush1.msra.mxu0 %v147
    %243 = vmatprep.subr.mxu0 0.0
    %244 = vmatpush1.msra.mxu0 0.0
    %245 = vmatprep.subr.mxu0 0.0
    %246 = vmatpush1.msra.mxu0 0.0
    %247 = vmatprep.subr.mxu0 0.0
    %248 = vmatpush1.msra.mxu0 0.0
    %249 = vmatprep.subr.mxu0 0.0
    %250 = vmatpush1.msra.mxu0 0.0
    %251 = vmatprep.subr.mxu0 0.0
    %252 = vmatpush1.msra.mxu0 0.0
    %253 = vmatprep.subr.mxu0 0.0
    %254 = vmatpush1.msra.mxu0 0.0
    %255 = vmatprep.subr.mxu0 0.0
    %256 = vmatpush1.msra.mxu0 0.0
    %257 = vmatprep.subr.mxu0 0.0
    %258 = vmatpush1.msra.mxu0 0.0
    %259 = vmatprep.subr.mxu0 0.0
    %260 = vmatpush1.msra.mxu0 0.0
    %261 = vmatprep.subr.mxu0 0.0
    %262 = vmatpush1.msra.mxu0 0.0
    %263 = vmatprep.subr.mxu0 0.0
    %264 = vmatpush1.msra.mxu0 0.0
    %265 = vmatprep.subr.mxu0 0.0
    %266 = vmatpush1.msra.mxu0 0.0
    %267 = vmatprep.subr.mxu0 0.0
    %268 = vmatpush1.msra.mxu0 0.0
    %269 = vmatprep.subr.mxu0 0.0
    %270 = vmatpush1.msra.mxu0 0.0
    %271 = vmatprep.subr.mxu0 0.0
    %272 = vmatpush1.msra.mxu0 0.0
    %273 = vmatprep.subr.mxu0 0.0
    %274 = vmatpush1.msra.mxu0 0.0
    %275 = vmatprep.subr.mxu0 0.0
    %276 = vmatpush1.msra.mxu0 0.0
    %277 = vmatprep.subr.mxu0 0.0
    %278 = vmatpush1.msra.mxu0 0.0
    %279 = vmatprep.subr.mxu0 0.0
    %280 = vmatpush1.msra.mxu0 0.0
    %281 = vmatprep.subr.mxu0 0.0
    %282 = vmatpush1.msra.mxu0 0.0
    %283 = vmatprep.subr.mxu0 0.0
    %284 = vmatpush1.msra.mxu0 0.0
    %285 = vmatprep.subr.mxu0 0.0
    %286 = vmatpush1.msra.mxu0 0.0
    %287 = vmatprep.subr.mxu0 0.0
    %288 = vmatpush1.msra.mxu0 0.0
    %289 = vmatprep.subr.mxu0 0.0
    %290 = vmatpush1.msra.mxu0 0.0
    %291 = vmatprep.subr.mxu0 0.0
    %292 = vmatpush1.msra.mxu0 0.0
    %293 = vmatprep.subr.mxu0 0.0
    %294 = vmatpush1.msra.mxu0 0.0
    %295 = vmatprep.subr.mxu0 0.0
    %296 = vmatpush1.msra.mxu0 0.0
    %297 = vmatprep.subr.mxu0 0.0
    %298 = vmatpush1.msra.mxu0 0.0
    %299 = vmatprep.mubr.f32.mxu0 0.0
    %300 = vmatmul.mubr.f32.gmra.mrb[0].mxu0 %v157
    %v301 = vpop.f32.mrb[0].mxu0
    %v302 = vadd.f32 %v233, %v301
    %v303 = vpop.f32.mrb[0].mxu0
    %304 = vdwg.mxu0
    %v305 = vmul.f32 %v302, 0.5
    %v306 = vmul.f32 %v305, 1.442695
    %v307 = vpow.pop %v306
    %v308 = vld [vmem:[%s1] sm:$0xff]
    %v309 = vmul.f32 %v308, %v307
    %v310 = vadd.f32 %v226, %v309
    %v311 = vld [vmem:[%s8] sm:$0xff]
    %v312 = vld [vmem:[%s9] sm:$0x1]
    %v314 = vlaneseq
    %v315 = vshrl.u32 %v314, 7
    %v316 = vsub.s32 0, %v315
    %v317 = vrot.slane %v312, %v316
    %vm319 = vcmask 64512
    %v321 = vsel %vm319, %v310, 0
    %323 = vmatprep.subr.mxu0 0.0
    %324 = vmatpush1.msra.mxu0 %v311
    %325 = vmatprep.subr.mxu0 0.0
    %326 = vmatpush1.msra.mxu0 0.0
    %327 = vmatprep.subr.mxu0 0.0
    %328 = vmatpush1.msra.mxu0 0.0
    %329 = vmatprep.subr.mxu0 0.0
    %330 = vmatpush1.msra.mxu0 0.0
    %331 = vmatprep.subr.mxu0 0.0
    %332 = vmatpush1.msra.mxu0 0.0
    %333 = vmatprep.subr.mxu0 0.0
    %334 = vmatpush1.msra.mxu0 0.0
    %335 = vmatprep.subr.mxu0 0.0
    %336 = vmatpush1.msra.mxu0 0.0
    %337 = vmatprep.subr.mxu0 0.0
    %338 = vmatpush1.msra.mxu0 0.0
    %339 = vmatprep.subr.mxu0 0.0
    %340 = vmatpush1.msra.mxu0 0.0
    %341 = vmatprep.subr.mxu0 0.0
    %342 = vmatpush1.msra.mxu0 0.0
    %343 = vmatprep.subr.mxu0 0.0
    %344 = vmatpush1.msra.mxu0 0.0
    %345 = vmatprep.subr.mxu0 0.0
    %346 = vmatpush1.msra.mxu0 0.0
    %347 = vmatprep.subr.mxu0 0.0
    %348 = vmatpush1.msra.mxu0 0.0
    %349 = vmatprep.subr.mxu0 0.0
    %350 = vmatpush1.msra.mxu0 0.0
    %351 = vmatprep.subr.mxu0 0.0
    %352 = vmatpush1.msra.mxu0 0.0
    %353 = vmatprep.subr.mxu0 0.0
    %354 = vmatpush1.msra.mxu0 0.0
    %355 = vmatprep.subr.mxu0 0.0
    %356 = vmatpush1.msra.mxu0 0.0
    %357 = vmatprep.subr.mxu0 0.0
    %358 = vmatpush1.msra.mxu0 0.0
    %359 = vmatprep.subr.mxu0 0.0
    %360 = vmatpush1.msra.mxu0 0.0
    %361 = vmatprep.subr.mxu0 0.0
    %362 = vmatpush1.msra.mxu0 0.0
    %363 = vmatprep.subr.mxu0 0.0
    %364 = vmatpush1.msra.mxu0 0.0
    %365 = vmatprep.subr.mxu0 0.0
    %366 = vmatpush1.msra.mxu0 0.0
    %367 = vmatprep.subr.mxu0 0.0
    %368 = vmatpush1.msra.mxu0 0.0
    %369 = vmatprep.subr.mxu0 0.0
    %370 = vmatpush1.msra.mxu0 0.0
    %371 = vmatprep.subr.mxu0 0.0
    %372 = vmatpush1.msra.mxu0 0.0
    %373 = vmatprep.subr.mxu0 0.0
    %374 = vmatpush1.msra.mxu0 0.0
    %375 = vmatprep.subr.mxu0 0.0
    %376 = vmatpush1.msra.mxu0 0.0
    %377 = vmatprep.subr.mxu0 0.0
    %378 = vmatpush1.msra.mxu0 0.0
    %379 = vmatprep.subr.mxu0 0.0
    %380 = vmatpush1.msra.mxu0 0.0
    %381 = vmatprep.subr.mxu0 0.0
    %382 = vmatpush1.msra.mxu0 0.0
    %383 = vmatprep.subr.mxu0 0.0
    %384 = vmatpush1.msra.mxu0 0.0
    %385 = vmatprep.subr.mxu0 0.0
    %386 = vmatpush1.msra.mxu0 0.0
    %387 = vmatprep.mubr.f32.mxu0 0.0
    %388 = vmatmul.mubr.f32.gmra.mrb[0].mxu0 %v321
    %v389 = vpop.f32.mrb[0].mxu0
    %v390 = vadd.f32 %v317, %v389
    %v391 = vpop.f32.mrb[0].mxu0
    %392 = vdwg.mxu0
    %v393 = vmax.f32 %v390, 0.0
    %v394 = vld [vmem:[%s10] sm:$0xff]
    %v395 = vld [vmem:[%s10 + $0x8] sm:$0xff]
    %v396 = vld [vmem:[%s10 + $0x10] sm:$0xff]
    %v397 = vld [vmem:[%s10 + $0x18] sm:$0xff]
    %v398 = vld [vmem:[%s11] sm:$0x1]
    %v400 = vlaneseq
    %v401 = vshrl.u32 %v400, 7
    %v402 = vsub.s32 0, %v401
    %v403 = vrot.slane %v398, %v402
    %v406 = vsel %vm155, %v393, 0
    %408 = vmatprep.subr.mxu0 0.0
    %409 = vmatpush1.msra.mxu0 %v394
    %410 = vmatprep.subr.mxu0 0.0
    %411 = vmatpush1.msra.mxu0 %v395
    %412 = vmatprep.subr.mxu0 0.0
    %413 = vmatpush1.msra.mxu0 %v396
    %414 = vmatprep.subr.mxu0 0.0
    %415 = vmatpush1.msra.mxu0 %v397
    %416 = vmatprep.subr.mxu0 0.0
    %417 = vmatpush1.msra.mxu0 0.0
    %418 = vmatprep.subr.mxu0 0.0
    %419 = vmatpush1.msra.mxu0 0.0
    %420 = vmatprep.subr.mxu0 0.0
    %421 = vmatpush1.msra.mxu0 0.0
    %422 = vmatprep.subr.mxu0 0.0
    %423 = vmatpush1.msra.mxu0 0.0
    %424 = vmatprep.subr.mxu0 0.0
    %425 = vmatpush1.msra.mxu0 0.0
    %426 = vmatprep.subr.mxu0 0.0
    %427 = vmatpush1.msra.mxu0 0.0
    %428 = vmatprep.subr.mxu0 0.0
    %429 = vmatpush1.msra.mxu0 0.0
    %430 = vmatprep.subr.mxu0 0.0
    %431 = vmatpush1.msra.mxu0 0.0
    %432 = vmatprep.subr.mxu0 0.0
    %433 = vmatpush1.msra.mxu0 0.0
    %434 = vmatprep.subr.mxu0 0.0
    %435 = vmatpush1.msra.mxu0 0.0
    %436 = vmatprep.subr.mxu0 0.0
    %437 = vmatpush1.msra.mxu0 0.0
    %438 = vmatprep.subr.mxu0 0.0
    %439 = vmatpush1.msra.mxu0 0.0
    %440 = vmatprep.subr.mxu0 0.0
    %441 = vmatpush1.msra.mxu0 0.0
    %442 = vmatprep.subr.mxu0 0.0
    %443 = vmatpush1.msra.mxu0 0.0
    %444 = vmatprep.subr.mxu0 0.0
    %445 = vmatpush1.msra.mxu0 0.0
    %446 = vmatprep.subr.mxu0 0.0
    %447 = vmatpush1.msra.mxu0 0.0
    %448 = vmatprep.subr.mxu0 0.0
    %449 = vmatpush1.msra.mxu0 0.0
    %450 = vmatprep.subr.mxu0 0.0
    %451 = vmatpush1.msra.mxu0 0.0
    %452 = vmatprep.subr.mxu0 0.0
    %453 = vmatpush1.msra.mxu0 0.0
    %454 = vmatprep.subr.mxu0 0.0
    %455 = vmatpush1.msra.mxu0 0.0
    %456 = vmatprep.subr.mxu0 0.0
    %457 = vmatpush1.msra.mxu0 0.0
    %458 = vmatprep.subr.mxu0 0.0
    %459 = vmatpush1.msra.mxu0 0.0
    %460 = vmatprep.subr.mxu0 0.0
    %461 = vmatpush1.msra.mxu0 0.0
    %462 = vmatprep.subr.mxu0 0.0
    %463 = vmatpush1.msra.mxu0 0.0
    %464 = vmatprep.subr.mxu0 0.0
    %465 = vmatpush1.msra.mxu0 0.0
    %466 = vmatprep.subr.mxu0 0.0
    %467 = vmatpush1.msra.mxu0 0.0
    %468 = vmatprep.subr.mxu0 0.0
    %469 = vmatpush1.msra.mxu0 0.0
    %470 = vmatprep.subr.mxu0 0.0
    %471 = vmatpush1.msra.mxu0 0.0
    %472 = vmatprep.mubr.f32.mxu0 0.0
    %473 = vmatmul.mubr.f32.gmra.mrb[0].mxu0 %v406
    %v474 = vpop.f32.mrb[0].mxu0
    %v475 = vadd.f32 %v403, %v474
    %v476 = vpop.f32.mrb[0].mxu0
    %477 = vdwg.mxu0
    %v478 = vxor.u32 %v475, 2147483648
    %v479 = vmul.f32 %v478, 1.442695
    %v480 = vpow.pop %v479
    %v481 = vadd.f32 %v480, 1.0
    %v482 = vrcp.pop %v481
    %v483 = vmul.f32 1.0, %v482
    %484 = vst.msk [vmem:[#allocation2] sm:$0xff] %vm319, %v310
    %485 = vst.msk [vmem:[#allocation4] sm:$0xff] %vm319, %v226
    %486 = vst.msk [vmem:[#allocation6] sm:$0xff] %vm319, %v302
    %487 = vst.msk [vmem:[#allocation7] sm:$0xff] %vm64, %v483
    // Predicated region
    $region50: #{vae_forward.1} parent=1 // pred_check
      _
    $region51: #{vae_forward.1} parent=1 // pred_check_branch
      %489 = sbr.rel (0) target = $region53
    $region52: #{vae_forward.1} parent=1 // pred_region
      %s491 = ssub.s32 128, 128
      %492 = vsyncadd [#allocation3], %s491
      %s494 = sshll.u32 [#allocation2], 4
      %s495 = int_to_ptr.vmem [resolvable:$true] %s494
      %497 = dma.vmem_to_hbm [thread:$0]  %s495, 128, %s12, [#allocation3]
    $region53: #{vae_forward.1} parent=1 // pred_fallthru
      _
    // Predicated region
    $region54: #{vae_forward.1} parent=1 // pred_check
      _
    $region55: #{vae_forward.1} parent=1 // pred_check_branch
      %499 = sbr.rel (0) target = $region57
    $region56: #{vae_forward.1} parent=1 // pred_region
      %s501 = ssub.s32 128, 128
      %502 = vsyncadd [#allocation5], %s501
      %s504 = sshll.u32 [#allocation4], 4
      %s505 = int_to_ptr.vmem [resolvable:$true] %s504
      %507 = dma.vmem_to_hbm [thread:$0]  %s505, 128, %s13, [#allocation5]
    $region57: #{vae_forward.1} parent=1 // pred_fallthru
      _
    // Predicated region
    $region58: #{vae_forward.1} parent=1 // pred_check
      _
    $region59: #{vae_forward.1} parent=1 // pred_check_branch
      %509 = sbr.rel (0) target = $region61
    $region60: #{vae_forward.1} parent=1 // pred_region
      %s511 = ssub.s32 128, 128
      %512 = vsyncadd [#allocation5], %s511
      %s514 = sshll.u32 [#allocation6], 4
      %s515 = int_to_ptr.vmem [resolvable:$true] %s514
      %517 = dma.vmem_to_hbm [thread:$0]  %s515, 128, %s14, [#allocation5]
    $region61: #{vae_forward.1} parent=1 // pred_fallthru
      _
    // Predicated region
    $region62: #{vae_forward.1} parent=1 // pred_check
      _
    $region63: #{vae_forward.1} parent=1 // pred_check_branch
      %519 = sbr.rel (0) target = $region65
    $region64: #{vae_forward.1} parent=1 // pred_region
      %s521 = ssub.s32 128, 128
      %522 = vsyncadd [#allocation8], %s521
      %s524 = sshll.u32 [#allocation7], 4
      %s525 = int_to_ptr.vmem [resolvable:$true] %s524
      %527 = dma.vmem_to_hbm [thread:$0]  %s525, 128, %s15, [#allocation8]
    $region65: #{vae_forward.1} parent=1 // pred_fallthru
      _
    // Predicated region
    $region66: #{vae_forward.1} parent=1 // pred_check
      _
    $region67: #{vae_forward.1} parent=1 // pred_check_branch
      %529 = sbr.rel (0) target = $region69
    $region68: #{vae_forward.1} parent=1 // pred_region
      %530 = dma.done [#allocation3], 128
    $region69: #{vae_forward.1} parent=1 // pred_fallthru
      _
    // Predicated region
    $region70: #{vae_forward.1} parent=1 // pred_check
      _
    $region71: #{vae_forward.1} parent=1 // pred_check_branch
      %532 = sbr.rel (0) target = $region73
    $region72: #{vae_forward.1} parent=1 // pred_region
      %533 = dma.done [#allocation5], 128
    $region73: #{vae_forward.1} parent=1 // pred_fallthru
      _
    // Predicated region
    $region74: #{vae_forward.1} parent=1 // pred_check
      _
    $region75: #{vae_forward.1} parent=1 // pred_check_branch
      %535 = sbr.rel (0) target = $region77
    $region76: #{vae_forward.1} parent=1 // pred_region
      %536 = dma.done [#allocation5], 128
    $region77: #{vae_forward.1} parent=1 // pred_fallthru
      _
    // Predicated region
    $region78: #{vae_forward.1} parent=1 // pred_check
      _
    $region79: #{vae_forward.1} parent=1 // pred_check_branch
      %538 = sbr.rel (0) target = $region81
    $region80: #{vae_forward.1} parent=1 // pred_region
      %539 = dma.done [#allocation8], 128
    $region81: #{vae_forward.1} parent=1 // pred_fallthru
      _
    %540 = vsyncpa [#allocation3], 1
    %541 = vsyncpa [#allocation5], 1
    %542 = vsyncpa [#allocation8], 1

</llo_original>
